<compile_context>
chip_gen: v7x
topology: tpu7x:2x2x1
jax: 0.10.0
libtpu: 0.0.40
codegen_flags: <defaults>
</compile_context>

<pallas_src>
import jax
import jax.numpy as jnp
from jax.experimental import pallas as pl
from jax.experimental.pallas import tpu as pltpu


_GROUP = 8  # sublane-aligned row group processed per inner step


def _soft_criterion_kernel(pred_ref, idxs_ref, stm_ref, out_ref, acc_ref):
    t = pl.program_id(1)
    v = pl.program_id(2)

    @pl.when((t == 0) & (v == 0))
    def _():
        acc_ref[...] = jnp.zeros_like(acc_ref)

    TR, TV = pred_ref.shape
    K = idxs_ref.shape[-1]
    lacc = acc_ref.shape[-1]
    n_groups = TR // _GROUP
    v0 = v * TV                       # global lane offset of this V tile

    def group_body(g, acc):
        if isinstance(g, int):
            r0 = g * _GROUP
        else:
            r0 = pl.multiple_of(g * _GROUP, _GROUP)
        p = pred_ref[pl.ds(r0, _GROUP), :].astype(jnp.float32)    # (8, TV)
        idx = idxs_ref[pl.ds(r0, _GROUP), :]                      # (8, K) int32
        st = stm_ref[pl.ds(r0, _GROUP), :]                        # (8, K) = -soft_target*mask
        vid = v0 + jax.lax.broadcasted_iota(jnp.int32, (_GROUP, TV), 1)

        # Fused additive one-hot gather (duplicate indices sum, like gather).
        if K >= 8:                                # two chains break the serial add dep
            w0 = jnp.zeros((_GROUP, TV), jnp.float32)
            w1 = jnp.zeros((_GROUP, TV), jnp.float32)
            for k in range(K):
                sel = jnp.where(vid == idx[:, k:k + 1], st[:, k:k + 1], 0.0)
                if k % 2 == 0:
                    w0 = w0 + sel
                else:
                    w1 = w1 + sel
            w = w0 + w1
        else:
            w = jnp.where(vid == idx[:, 0:1], st[:, 0:1], 0.0)
            for k in range(1, K):
                w = w + jnp.where(vid == idx[:, k:k + 1], st[:, k:k + 1], 0.0)

        pw = p * w                                 # (8, TV)
        if TV != lacc:                             # fold lanes down to one vreg (VALU only)
            pw = pw.reshape(_GROUP, TV // lacc, lacc).sum(axis=1)
        return acc + pw

    acc0 = jnp.zeros((_GROUP, lacc), jnp.float32)
    if n_groups <= 16:
        acc_tile = acc0
        for g in range(n_groups):                  # fully static unroll for short tiles
            acc_tile = group_body(g, acc_tile)
    else:
        acc_tile = jax.lax.fori_loop(0, n_groups, group_body, acc0, unroll=8)

    acc_ref[...] += acc_tile                       # one vreg RMW per grid step

    @pl.when((t == pl.num_programs(1) - 1) & (v == pl.num_programs(2) - 1))
    def _():
        total = jnp.sum(acc_ref[...])              # one tiny reduction per chunk
        out_ref[...] = jnp.broadcast_to(total, out_ref.shape)


def soft_criterion(pred, idxs, soft_target, mask, *,
                   row_tile=None, v_tile=None, num_chunks=None):
    """pred: (B,S,V) float, idxs: (B,S,K) int, soft_target: (B,S,K), mask: (B,S)."""
    B, S, V = pred.shape
    K = idxs.shape[-1]
    R = B * S

    # Wrapper-side preprocessing (small tensors only; pred keeps native dtype).
    pred2 = pred.reshape(R, V)
    idxs2 = idxs.reshape(R, K).astype(jnp.int32)
    stm2 = (-soft_target.astype(jnp.float32)
            * mask.astype(jnp.float32)[..., None]).reshape(R, K)
    den = jnp.sum(mask.astype(jnp.float32))        # denominator in plain XLA

    itemsize = jnp.dtype(pred2.dtype).itemsize

    # Generation-aware budgets (conservative v7x fallback if query fails).
    detected = True
    try:
        vmem_cap = int(pltpu.get_tpu_info().vmem_capacity_bytes)
    except Exception:
        vmem_cap = 64 * 1024 * 1024
        detected = False
    budget = min(8 * 1024 * 1024, vmem_cap // 16)      # target pred-block bytes
    vmem_limit = min(64 * 1024 * 1024, vmem_cap // 2)

    if num_chunks is None:
        # 64 MiB VMEM/TC => v7x-class chip with 2 TensorCores: one chunk per core.
        num_chunks = 2 if (detected and vmem_cap <= 64 * 1024 * 1024) else 1
    num_chunks = max(1, min(num_chunks, -(-R // _GROUP)))

    # Tile selection: block width decoupled from V.
    if row_tile is None or v_tile is None:
        if V * itemsize * _GROUP <= budget:
            vt = V                                      # single full-width V tile
            rt = budget // max(1, V * itemsize)
            rt = max(_GROUP, min(1024, (rt // _GROUP) * _GROUP))
        else:
            rt = 64
            n_vt = -(-(V * rt * itemsize) // budget)
            vt = -(-V // n_vt)
            vt = ((vt + 127) // 128) * 128              # lane-aligned V tile
        if row_tile is None:
            row_tile = rt
        if v_tile is None:
            v_tile = vt
    assert row_tile % _GROUP == 0

    per_chunk_rows = -(-R // num_chunks)
    row_tile = min(row_tile,
                   max(_GROUP, ((per_chunk_rows + _GROUP - 1) // _GROUP) * _GROUP))
    tiles_per_chunk = -(-per_chunk_rows // row_tile)
    R_pad = num_chunks * tiles_per_chunk * row_tile

    n_v_tiles = -(-V // v_tile)
    V_pad = n_v_tiles * v_tile
    assert v_tile % 128 == 0 or n_v_tiles == 1

    if V_pad != V:
        pred2 = jnp.pad(pred2, ((0, R_pad - R), (0, V_pad - V)))
    elif R_pad != R:
        pred2 = jnp.pad(pred2, ((0, R_pad - R), (0, 0)))
    if R_pad != R:
        idxs2 = jnp.pad(idxs2, ((0, R_pad - R), (0, 0)))
        stm2 = jnp.pad(stm2, ((0, R_pad - R), (0, 0)))  # zero weight => zero contribution

    lacc = 128 if (v_tile % 128 == 0) else v_tile

    grid = (num_chunks, tiles_per_chunk, n_v_tiles)
    row_map = lambda c, t, v: (c * tiles_per_chunk + t, v)
    k_map = lambda c, t, v: (c * tiles_per_chunk + t, 0)

    flops = (3 * K + 3) * R_pad * V_pad
    bytes_accessed = (R_pad * V_pad * itemsize          # pred stream
                      + R_pad * K * (4 + 4)             # idxs + stm
                      + num_chunks * 128 * 4)           # partial outputs
    cost = pl.CostEstimate(flops=flops, transcendentals=0,
                           bytes_accessed=bytes_accessed)

    partials = pl.pallas_call(
        _soft_criterion_kernel,
        out_shape=jax.ShapeDtypeStruct((num_chunks, 1, 128), jnp.float32),
        grid_spec=pltpu.PrefetchScalarGridSpec(
            num_scalar_prefetch=0,
            grid=grid,
            in_specs=[
                pl.BlockSpec((row_tile, v_tile), row_map),
                pl.BlockSpec((row_tile, K), k_map),
                pl.BlockSpec((row_tile, K), k_map),
            ],
            out_specs=pl.BlockSpec((1, 1, 128), lambda c, t, v: (c, 0, 0)),
            scratch_shapes=[pltpu.VMEM((_GROUP, lacc), jnp.float32)],
        ),
        compiler_params=pltpu.CompilerParams(
            dimension_semantics=("parallel", "arbitrary", "arbitrary"),
            vmem_limit_bytes=vmem_limit),
        cost_estimate=cost,
    )(pred2, idxs2, stm2)

    num = jnp.sum(partials[:, 0, 0])
    return (num / den).astype(jnp.float32)


def soft_criterion_ref(pred, idxs, soft_target, mask):
    gathered = jnp.take_along_axis(pred, idxs, axis=-1)
    topk = -1.0 * gathered * mask[..., None]
    return (jnp.sum(soft_target * topk) / jnp.sum(mask)).astype(jnp.float32)


if __name__ == "__main__":
    B, S, V, K = 2, 8, 32, 4
    key = jax.random.PRNGKey(0)
    k1, k2, k3, k4 = jax.random.split(key, 4)

    pred = jax.random.normal(k1, (B, S, V), dtype=jnp.float32)
    idxs = jax.random.randint(k2, (B, S, K), 0, V, dtype=jnp.int32)
    soft_target = jax.random.uniform(k3, (B, S, K), dtype=jnp.float32)
    mask = (jax.random.uniform(k4, (B, S)) > 0.3).astype(jnp.float32)

    out = soft_criterion(pred, idxs, soft_target, mask)
    out = jax.block_until_ready(out)

    ref = soft_criterion_ref(pred, idxs, soft_target, mask)
    assert jnp.allclose(out, ref, rtol=1e-5, atol=1e-5), (out, ref)

    print("KERNEL_OK")
</pallas_src>

<mosaic_0001>
module attributes {stable_mosaic.version = 11 : i64} {
  func.func @_soft_criterion_kernel(%arg0: i32, %arg1: i32, %arg2: i32, %arg3: memref<16x32xf32, #tpu.memory_space<vmem>>, %arg4: memref<16x4xi32, #tpu.memory_space<vmem>>, %arg5: memref<16x4xf32, #tpu.memory_space<vmem>>, %arg6: memref<1x1x128xf32, #tpu.memory_space<vmem>>, %arg7: memref<8x32xf32, #tpu.memory_space<vmem>>) attributes {dimension_semantics = [#tpu.dimension_semantics<parallel>, #tpu.dimension_semantics<arbitrary>, #tpu.dimension_semantics<arbitrary>], iteration_bounds = array<i64: 1, 1, 1>, scalar_prefetch = 0 : i64, scratch_operands = 1 : i64, tpu.core_type = #tpu.core_type<tc>, window_params = [{transform_indices = @transform_0, window_bounds = array<i64: 16, 32>}, {transform_indices = @transform_1, window_bounds = array<i64: 16, 4>}, {transform_indices = @transform_2, window_bounds = array<i64: 16, 4>}, {transform_indices = @transform_3, window_bounds = array<i64: 1, 1, 128>}]} {
    %c0_i32 = arith.constant 0 : i32
    %0 = arith.cmpi eq, %arg1, %c0_i32 : i32
    %c0_i32_0 = arith.constant 0 : i32
    %1 = arith.cmpi eq, %arg2, %c0_i32_0 : i32
    %2 = arith.andi %0, %1 : i1
    %3 = arith.extui %2 : i1 to i32
    %c0_i32_1 = arith.constant 0 : i32
    %4 = arith.cmpi ne, %3, %c0_i32_1 : i32
    scf.if %4 {
      %cst_27 = arith.constant 0.000000e+00 : f32
      %101 = vector.broadcast %cst_27 : f32 to vector<8x32xf32>
      %c0_28 = arith.constant 0 : index
      %c0_29 = arith.constant 0 : index
      %102 = vector.load %arg7[%c0_28, %c0_29] : memref<8x32xf32, #tpu.memory_space<vmem>>, vector<8x32xf32>
      tpu.vector_store %arg7[%c0_28, %c0_29], %101 {strides = array<i32>} : memref<8x32xf32, #tpu.memory_space<vmem>>, vector<8x32xf32>,
    } else {
    }
    %c32_i32 = arith.constant 32 : i32
    %5 = arith.muli %arg2, %c32_i32 : i32
    %cst = arith.constant 0.000000e+00 : f32
    %6 = vector.broadcast %cst : f32 to vector<8x32xf32>
    %c0 = arith.constant 0 : index
    %c0_2 = arith.constant 0 : index
    %7 = vector.load %arg3[%c0, %c0_2] : memref<16x32xf32, #tpu.memory_space<vmem>>, vector<8x32xf32>
    %c0_3 = arith.constant 0 : index
    %c0_4 = arith.constant 0 : index
    %8 = vector.load %arg4[%c0_3, %c0_4] : memref<16x4xi32, #tpu.memory_space<vmem>>, vector<8x4xi32>
    %c0_5 = arith.constant 0 : index
    %c0_6 = arith.constant 0 : index
    %9 = vector.load %arg5[%c0_5, %c0_6] : memref<16x4xf32, #tpu.memory_space<vmem>>, vector<8x4xf32>
    %10 = tpu.iota {dimensions = array<i32: 1>} : vector<8x32xi32>
    %11 = vector.broadcast %5 : i32 to vector<8x32xi32>
    %12 = arith.addi %11, %10 : vector<8x32xi32>
    %13 = vector.extract_strided_slice %8 {offsets = [0, 0], sizes = [8, 1], strides = [1, 1]} : vector<8x4xi32> to vector<8x1xi32>
    %14 = vector.broadcast %13 : vector<8x1xi32> to vector<8x32xi32>
    %15 = arith.cmpi eq, %12, %14 : vector<8x32xi32>
    %16 = vector.extract_strided_slice %9 {offsets = [0, 0], sizes = [8, 1], strides = [1, 1]} : vector<8x4xf32> to vector<8x1xf32>
    %cst_7 = arith.constant 0.000000e+00 : f32
    %17 = vector.shape_cast %16 : vector<8x1xf32> to vector<8x1xf32>
    %18 = vector.broadcast %17 : vector<8x1xf32> to vector<8x32xf32>
    %19 = vector.broadcast %cst_7 : f32 to vector<8x32xf32>
    %20 = arith.select %15, %18, %19 : vector<8x32xi1>, vector<8x32xf32>
    %21 = vector.extract_strided_slice %8 {offsets = [0, 1], sizes = [8, 1], strides = [1, 1]} : vector<8x4xi32> to vector<8x1xi32>
    %22 = vector.broadcast %21 : vector<8x1xi32> to vector<8x32xi32>
    %23 = arith.cmpi eq, %12, %22 : vector<8x32xi32>
    %24 = vector.extract_strided_slice %9 {offsets = [0, 1], sizes = [8, 1], strides = [1, 1]} : vector<8x4xf32> to vector<8x1xf32>
    %cst_8 = arith.constant 0.000000e+00 : f32
    %25 = vector.shape_cast %24 : vector<8x1xf32> to vector<8x1xf32>
    %26 = vector.broadcast %25 : vector<8x1xf32> to vector<8x32xf32>
    %27 = vector.broadcast %cst_8 : f32 to vector<8x32xf32>
    %28 = arith.select %23, %26, %27 : vector<8x32xi1>, vector<8x32xf32>
    %29 = arith.addf %20, %28 : vector<8x32xf32>
    %30 = vector.extract_strided_slice %8 {offsets = [0, 2], sizes = [8, 1], strides = [1, 1]} : vector<8x4xi32> to vector<8x1xi32>
    %31 = vector.broadcast %30 : vector<8x1xi32> to vector<8x32xi32>
    %32 = arith.cmpi eq, %12, %31 : vector<8x32xi32>
    %33 = vector.extract_strided_slice %9 {offsets = [0, 2], sizes = [8, 1], strides = [1, 1]} : vector<8x4xf32> to vector<8x1xf32>
    %cst_9 = arith.constant 0.000000e+00 : f32
    %34 = vector.shape_cast %33 : vector<8x1xf32> to vector<8x1xf32>
    %35 = vector.broadcast %34 : vector<8x1xf32> to vector<8x32xf32>
    %36 = vector.broadcast %cst_9 : f32 to vector<8x32xf32>
    %37 = arith.select %32, %35, %36 : vector<8x32xi1>, vector<8x32xf32>
    %38 = arith.addf %29, %37 : vector<8x32xf32>
    %39 = vector.extract_strided_slice %8 {offsets = [0, 3], sizes = [8, 1], strides = [1, 1]} : vector<8x4xi32> to vector<8x1xi32>
    %40 = vector.broadcast %39 : vector<8x1xi32> to vector<8x32xi32>
    %41 = arith.cmpi eq, %12, %40 : vector<8x32xi32>
    %42 = vector.extract_strided_slice %9 {offsets = [0, 3], sizes = [8, 1], strides = [1, 1]} : vector<8x4xf32> to vector<8x1xf32>
    %cst_10 = arith.constant 0.000000e+00 : f32
    %43 = vector.shape_cast %42 : vector<8x1xf32> to vector<8x1xf32>
    %44 = vector.broadcast %43 : vector<8x1xf32> to vector<8x32xf32>
    %45 = vector.broadcast %cst_10 : f32 to vector<8x32xf32>
    %46 = arith.select %41, %44, %45 : vector<8x32xi1>, vector<8x32xf32>
    %47 = arith.addf %38, %46 : vector<8x32xf32>
    %48 = arith.mulf %7, %47 : vector<8x32xf32>
    %49 = arith.addf %6, %48 : vector<8x32xf32>
    %c8 = arith.constant 8 : index
    %c0_11 = arith.constant 0 : index
    %50 = vector.load %arg3[%c8, %c0_11] : memref<16x32xf32, #tpu.memory_space<vmem>>, vector<8x32xf32>
    %c8_12 = arith.constant 8 : index
    %c0_13 = arith.constant 0 : index
    %51 = vector.load %arg4[%c8_12, %c0_13] : memref<16x4xi32, #tpu.memory_space<vmem>>, vector<8x4xi32>
    %c8_14 = arith.constant 8 : index
    %c0_15 = arith.constant 0 : index
    %52 = vector.load %arg5[%c8_14, %c0_15] : memref<16x4xf32, #tpu.memory_space<vmem>>, vector<8x4xf32>
    %53 = tpu.iota {dimensions = array<i32: 1>} : vector<8x32xi32>
    %54 = vector.broadcast %5 : i32 to vector<8x32xi32>
    %55 = arith.addi %54, %53 : vector<8x32xi32>
    %56 = vector.extract_strided_slice %51 {offsets = [0, 0], sizes = [8, 1], strides = [1, 1]} : vector<8x4xi32> to vector<8x1xi32>
    %57 = vector.broadcast %56 : vector<8x1xi32> to vector<8x32xi32>
    %58 = arith.cmpi eq, %55, %57 : vector<8x32xi32>
    %59 = vector.extract_strided_slice %52 {offsets = [0, 0], sizes = [8, 1], strides = [1, 1]} : vector<8x4xf32> to vector<8x1xf32>
    %cst_16 = arith.constant 0.000000e+00 : f32
    %60 = vector.shape_cast %59 : vector<8x1xf32> to vector<8x1xf32>
    %61 = vector.broadcast %60 : vector<8x1xf32> to vector<8x32xf32>
    %62 = vector.broadcast %cst_16 : f32 to vector<8x32xf32>
    %63 = arith.select %58, %61, %62 : vector<8x32xi1>, vector<8x32xf32>
    %64 = vector.extract_strided_slice %51 {offsets = [0, 1], sizes = [8, 1], strides = [1, 1]} : vector<8x4xi32> to vector<8x1xi32>
    %65 = vector.broadcast %64 : vector<8x1xi32> to vector<8x32xi32>
    %66 = arith.cmpi eq, %55, %65 : vector<8x32xi32>
    %67 = vector.extract_strided_slice %52 {offsets = [0, 1], sizes = [8, 1], strides = [1, 1]} : vector<8x4xf32> to vector<8x1xf32>
    %cst_17 = arith.constant 0.000000e+00 : f32
    %68 = vector.shape_cast %67 : vector<8x1xf32> to vector<8x1xf32>
    %69 = vector.broadcast %68 : vector<8x1xf32> to vector<8x32xf32>
    %70 = vector.broadcast %cst_17 : f32 to vector<8x32xf32>
    %71 = arith.select %66, %69, %70 : vector<8x32xi1>, vector<8x32xf32>
    %72 = arith.addf %63, %71 : vector<8x32xf32>
    %73 = vector.extract_strided_slice %51 {offsets = [0, 2], sizes = [8, 1], strides = [1, 1]} : vector<8x4xi32> to vector<8x1xi32>
    %74 = vector.broadcast %73 : vector<8x1xi32> to vector<8x32xi32>
    %75 = arith.cmpi eq, %55, %74 : vector<8x32xi32>
    %76 = vector.extract_strided_slice %52 {offsets = [0, 2], sizes = [8, 1], strides = [1, 1]} : vector<8x4xf32> to vector<8x1xf32>
    %cst_18 = arith.constant 0.000000e+00 : f32
    %77 = vector.shape_cast %76 : vector<8x1xf32> to vector<8x1xf32>
    %78 = vector.broadcast %77 : vector<8x1xf32> to vector<8x32xf32>
    %79 = vector.broadcast %cst_18 : f32 to vector<8x32xf32>
    %80 = arith.select %75, %78, %79 : vector<8x32xi1>, vector<8x32xf32>
    %81 = arith.addf %72, %80 : vector<8x32xf32>
    %82 = vector.extract_strided_slice %51 {offsets = [0, 3], sizes = [8, 1], strides = [1, 1]} : vector<8x4xi32> to vector<8x1xi32>
    %83 = vector.broadcast %82 : vector<8x1xi32> to vector<8x32xi32>
    %84 = arith.cmpi eq, %55, %83 : vector<8x32xi32>
    %85 = vector.extract_strided_slice %52 {offsets = [0, 3], sizes = [8, 1], strides = [1, 1]} : vector<8x4xf32> to vector<8x1xf32>
    %cst_19 = arith.constant 0.000000e+00 : f32
    %86 = vector.shape_cast %85 : vector<8x1xf32> to vector<8x1xf32>
    %87 = vector.broadcast %86 : vector<8x1xf32> to vector<8x32xf32>
    %88 = vector.broadcast %cst_19 : f32 to vector<8x32xf32>
    %89 = arith.select %84, %87, %88 : vector<8x32xi1>, vector<8x32xf32>
    %90 = arith.addf %81, %89 : vector<8x32xf32>
    %91 = arith.mulf %50, %90 : vector<8x32xf32>
    %92 = arith.addf %49, %91 : vector<8x32xf32>
    %c0_20 = arith.constant 0 : index
    %c0_21 = arith.constant 0 : index
    %93 = vector.load %arg7[%c0_20, %c0_21] : memref<8x32xf32, #tpu.memory_space<vmem>>, vector<8x32xf32>
    %94 = arith.addf %93, %92 : vector<8x32xf32>
    %c0_22 = arith.constant 0 : index
    %c0_23 = arith.constant 0 : index
    %95 = vector.load %arg7[%c0_22, %c0_23] : memref<8x32xf32, #tpu.memory_space<vmem>>, vector<8x32xf32>
    tpu.vector_store %arg7[%c0_22, %c0_23], %94 {strides = array<i32>} : memref<8x32xf32, #tpu.memory_space<vmem>>, vector<8x32xf32>,
    %c0_i32_24 = arith.constant 0 : i32
    %96 = arith.cmpi eq, %arg1, %c0_i32_24 : i32
    %c0_i32_25 = arith.constant 0 : i32
    %97 = arith.cmpi eq, %arg2, %c0_i32_25 : i32
    %98 = arith.andi %96, %97 : i1
    %99 = arith.extui %98 : i1 to i32
    %c0_i32_26 = arith.constant 0 : i32
    %100 = arith.cmpi ne, %99, %c0_i32_26 : i32
    scf.if %100 {
      %c0_27 = arith.constant 0 : index
      %c0_28 = arith.constant 0 : index
      %101 = vector.load %arg7[%c0_27, %c0_28] : memref<8x32xf32, #tpu.memory_space<vmem>>, vector<8x32xf32>
      %102 = vector.shape_cast %101 : vector<8x32xf32> to vector<1x8x32xf32>
      %cst_29 = arith.constant dense<0.000000e+00> : vector<1xf32>
      %103 = vector.multi_reduction <add>, %102, %cst_29 [1, 2] : vector<1x8x32xf32> to vector<1xf32>
      %104 = vector.shape_cast %103 : vector<1xf32> to vector<1x1x1xf32>
      %105 = vector.extract %104[0, 0, 0] : f32 from vector<1x1x1xf32>
      %106 = vector.broadcast %105 : f32 to vector<1x1x128xf32>
      %c0_30 = arith.constant 0 : index
      %c0_31 = arith.constant 0 : index
      %c0_32 = arith.constant 0 : index
      %107 = vector.load %arg6[%c0_30, %c0_31, %c0_32] : memref<1x1x128xf32, #tpu.memory_space<vmem>>, vector<1x1x128xf32>
      tpu.vector_store %arg6[%c0_30, %c0_31, %c0_32], %106 {strides = array<i32>} : memref<1x1x128xf32, #tpu.memory_space<vmem>>, vector<1x1x128xf32>,
    } else {
    }
    return
  }
  func.func @transform_0(%arg0: i32, %arg1: i32, %arg2: i32) -> (i32, i32) {
    %c1_i32 = arith.constant 1 : i32
    %0 = arith.muli %arg0, %c1_i32 : i32
    %1 = arith.addi %0, %arg1 : i32
    %c0_i32 = arith.constant 0 : i32
    return %1, %arg2 : i32, i32
  }
  func.func @transform_1(%arg0: i32, %arg1: i32, %arg2: i32) -> (i32, i32) {
    %c1_i32 = arith.constant 1 : i32
    %0 = arith.muli %arg0, %c1_i32 : i32
    %1 = arith.addi %0, %arg1 : i32
    %c0_i32 = arith.constant 0 : i32
    %c0_i32_0 = arith.constant 0 : i32
    return %1, %c0_i32 : i32, i32
  }
  func.func @transform_2(%arg0: i32, %arg1: i32, %arg2: i32) -> (i32, i32) {
    %c1_i32 = arith.constant 1 : i32
    %0 = arith.muli %arg0, %c1_i32 : i32
    %1 = arith.addi %0, %arg1 : i32
    %c0_i32 = arith.constant 0 : i32
    %c0_i32_0 = arith.constant 0 : i32
    return %1, %c0_i32 : i32, i32
  }
  func.func @transform_3(%arg0: i32, %arg1: i32, %arg2: i32) -> (i32, i32, i32) {
    %c0_i32 = arith.constant 0 : i32
    %c0_i32_0 = arith.constant 0 : i32
    %c0_i32_1 = arith.constant 0 : i32
    return %arg0, %c0_i32, %c0_i32_0 : i32, i32, i32
  }
}

</mosaic_0001>

<llo_original>
// kernel: tpu_custom_call.1
$region0: #{tpu_custom_call.1}
  #allocation0 [shape = 'u32[]', space=smem, size = 0x4, offset = 0x4, fixed_abs, tag = 'smem constant byte address 0x4 - core index']
  #allocation1 [shape = 'u32[144,128]{1,0:T(1,128)}', space=vmem, size = 0x12000, scoped, tag = 'internal scratch']
  #allocation2 [shape = 'f32[8,32]{1,0:T(8,128)}', space=vmem, size = 0x1000, scoped, tag = 'scratch operand']
  %s0 = inlined_call_operand.vmem [shape: f32[16,32], index: 0, kind: input, shape index: {}]
  %s1 = inlined_call_operand.vmem [shape: s32[16,4], index: 1, kind: input, shape index: {}]
  %s2 = inlined_call_operand.vmem [shape: f32[16,4], index: 2, kind: input, shape index: {}]
  %s3 = inlined_call_operand.hbm [shape: f32[1,1,128], index: 3, kind: output, shape index: {}]
  %s4 = sld [smem:[#allocation0]]
  $region30: #{tpu_custom_call.1} parent=0
    _
  %s6 = ssub.s32 1, %s4
  %s7 = scalar_select 0, %s6, %s4
  $region1: #{tpu_custom_call.1} parent=0
    #allocation3 [shape = 'u8[512]{0}', space=vmem, size = 0x400, scoped, tag = 'output window, operand 0, single buffered']
    #allocation4 [shape = 's32[1]{0}', space=sflag, size = 0x4, scoped, tag = 'scoped memory for tpu_custom_call.1']
    %8 = vsyncpa [#allocation4], 0
    // Predicated region
    $region2: #{tpu_custom_call.1} parent=1 // pred_check
      _
    $region3: #{tpu_custom_call.1} parent=1 // pred_check_branch
      %10 = sbr.rel (0) target = $region5
    $region4: #{tpu_custom_call.1} parent=1 // pred_region
      %s11 = sadd.s32 0, 0
      %s12 = smul.u32 2, %s11
      %p13 = scmp.lt.s32.totalorder %s12, 1
      %s14 = scalar_select %p13, %s12, 1
      %s15 = smul.addr %s14, 8
      %s16 = scalar_lea.vmem %s0, %s15
      %s17 = sadd.s32 0, 0
      %s18 = smul.u32 2, %s17
    $region5: #{tpu_custom_call.1} parent=1 // pred_fallthru
      _
    // Predicated region
    $region6: #{tpu_custom_call.1} parent=1 // pred_check
      _
    $region7: #{tpu_custom_call.1} parent=1 // pred_check_branch
      %20 = sbr.rel (0) target = $region9
    $region8: #{tpu_custom_call.1} parent=1 // pred_region
      %s21 = sadd.s32 0, 0
      %s22 = smul.u32 2, %s21
      %p23 = scmp.lt.s32.totalorder %s22, 1
      %s24 = scalar_select %p23, %s22, 1
      %s25 = smul.addr %s24, 8
      %s26 = scalar_lea.vmem %s1, %s25
      %s27 = sadd.s32 0, 0
      %s28 = smul.u32 2, %s27
    $region9: #{tpu_custom_call.1} parent=1 // pred_fallthru
      _
    // Predicated region
    $region10: #{tpu_custom_call.1} parent=1 // pred_check
      _
    $region11: #{tpu_custom_call.1} parent=1 // pred_check_branch
      %30 = sbr.rel (0) target = $region13
    $region12: #{tpu_custom_call.1} parent=1 // pred_region
      %s31 = sadd.s32 0, 0
      %s32 = smul.u32 2, %s31
      %p33 = scmp.lt.s32.totalorder %s32, 1
      %s34 = scalar_select %p33, %s32, 1
      %s35 = smul.addr %s34, 8
      %s36 = scalar_lea.vmem %s2, %s35
      %s37 = sadd.s32 0, 0
      %s38 = smul.u32 2, %s37
    $region13: #{tpu_custom_call.1} parent=1 // pred_fallthru
      _
    %s39 = sadd.s32 0, 0
    %s40 = smul.u32 2, %s39
    %p41 = scmp.lt.s32.totalorder %s40, 1
    %s42 = scalar_select %p41, %s40, 1
    %s43 = smul.addr %s42, 8
    %s44 = scalar_lea.vmem %s0, %s43
    %s45 = sadd.s32 0, 0
    %s46 = smul.u32 2, %s45
    %p47 = scmp.lt.s32.totalorder %s46, 1
    %s48 = scalar_select %p47, %s46, 1
    %s49 = smul.addr %s48, 8
    %s50 = scalar_lea.vmem %s1, %s49
    %s51 = sadd.s32 0, 0
    %s52 = smul.u32 2, %s51
    %p53 = scmp.lt.s32.totalorder %s52, 1
    %s54 = scalar_select %p53, %s52, 1
    %s55 = smul.addr %s54, 8
    %s56 = scalar_lea.vmem %s2, %s55
    %s57 = sadd.s32 0, 0
    %s58 = smul.u32 2, %s57
    %p59 = scmp.lt.s32.totalorder %s58, 1
    %s60 = scalar_select %p59, %s58, 1
    %s61 = smul.addr %s60, 8
    %s62 = scalar_lea.vmem %s0, %s61
    %s63 = sadd.s32 0, 0
    %s64 = smul.u32 2, %s63
    %s65 = sadd.s32 0, 0
    %s66 = smul.u32 2, %s65
    %p67 = scmp.lt.s32.totalorder %s66, 1
    %s68 = scalar_select %p67, %s66, 1
    %s69 = smul.addr %s68, 8
    %s70 = scalar_lea.vmem %s1, %s69
    %s71 = sadd.s32 0, 0
    %s72 = smul.u32 2, %s71
    %s73 = sadd.s32 0, 0
    %s74 = smul.u32 2, %s73
    %p75 = scmp.lt.s32.totalorder %s74, 1
    %s76 = scalar_select %p75, %s74, 1
    %s77 = smul.addr %s76, 8
    %s78 = scalar_lea.vmem %s2, %s77
    %s79 = sadd.s32 0, 0
    %s80 = smul.u32 2, %s79
    %p81 = scmp.eq.s32.totalorder 0, 0
    %p82 = scmp.eq.s32.totalorder 0, 0
    %p83 = pnand %p81, %p82
    %p84 = pneg %p83
    // Predicated region
    $region14: #{tpu_custom_call.1} parent=1 // pred_check
      _
    $region15: #{tpu_custom_call.1} parent=1 // pred_check_branch
      %86 = sbr.rel (%p83) target = $region17
    $region16: #{tpu_custom_call.1} parent=1 // pred_region
      %vm87 = vcmask 261120
      %88 = vst.msk [vmem:[#allocation2] sm:$0xff] %vm87, 0.0
    $region17: #{tpu_custom_call.1} parent=1 // pred_fallthru
      _
    %s89 = smul.u32 0, 32
    %v90 = vld [vmem:[%s62] sm:$0xff]
    %v91 = vld [vmem:[%s70] sm:$0xff]
    %v92 = vld [vmem:[%s78] sm:$0xff]
    %v93 = vlaneseq
    %v94 = vand.u32 %v93, 127
    %v95 = vstv %s89
    %v96 = vadd.s32 %v95, %v94
    %97 = vset.pattern.permute.xlu0 0
    %98 = vperm.xlu0 %97, %v91
    %v99 = vpop.permute.xlu0 %98
    %vm100 = vcmp.eq.s32.totalorder %v96, %v99
    %102 = vset.pattern.permute.xlu0 0
    %103 = vperm.xlu0 %102, %v92
    %v104 = vpop.permute.xlu0 %103
    %v106 = vsel %vm100, %v104, 0.0
    %107 = vset.pattern.permute.xlu0 1
    %108 = vperm.xlu0 %107, %v91
    %v109 = vpop.permute.xlu0 %108
    %vm110 = vcmp.eq.s32.totalorder %v96, %v109
    %111 = vset.pattern.permute.xlu0 1
    %112 = vperm.xlu0 %111, %v92
    %v113 = vpop.permute.xlu0 %112
    %v115 = vsel %vm110, %v113, 0.0
    %v116 = vadd.f32 %v106, %v115
    %117 = vset.pattern.permute.xlu0 2
    %118 = vperm.xlu0 %117, %v91
    %v119 = vpop.permute.xlu0 %118
    %vm120 = vcmp.eq.s32.totalorder %v96, %v119
    %121 = vset.pattern.permute.xlu0 2
    %122 = vperm.xlu0 %121, %v92
    %v123 = vpop.permute.xlu0 %122
    %v125 = vsel %vm120, %v123, 0.0
    %v126 = vadd.f32 %v116, %v125
    %127 = vset.pattern.permute.xlu0 3
    %128 = vperm.xlu0 %127, %v91
    %v129 = vpop.permute.xlu0 %128
    %vm130 = vcmp.eq.s32.totalorder %v96, %v129
    %131 = vset.pattern.permute.xlu0 3
    %132 = vperm.xlu0 %131, %v92
    %v133 = vpop.permute.xlu0 %132
    %v135 = vsel %vm130, %v133, 0.0
    %v136 = vadd.f32 %v126, %v135
    %v137 = vmul.f32 %v90, %v136
    %v138 = vadd.f32 %v137, 0.0
    %v139 = vld [vmem:[%s62 + $0x8] sm:$0xff]
    %v140 = vld [vmem:[%s70 + $0x8] sm:$0xff]
    %v141 = vld [vmem:[%s78 + $0x8] sm:$0xff]
    %142 = vset.pattern.permute.xlu0 0
    %143 = vperm.xlu0 %142, %v140
    %v144 = vpop.permute.xlu0 %143
    %vm145 = vcmp.eq.s32.totalorder %v96, %v144
    %147 = vset.pattern.permute.xlu0 0
    %148 = vperm.xlu0 %147, %v141
    %v149 = vpop.permute.xlu0 %148
    %v151 = vsel %vm145, %v149, 0.0
    %152 = vset.pattern.permute.xlu0 1
    %153 = vperm.xlu0 %152, %v140
    %v154 = vpop.permute.xlu0 %153
    %vm155 = vcmp.eq.s32.totalorder %v96, %v154
    %156 = vset.pattern.permute.xlu0 1
    %157 = vperm.xlu0 %156, %v141
    %v158 = vpop.permute.xlu0 %157
    %v160 = vsel %vm155, %v158, 0.0
    %v161 = vadd.f32 %v151, %v160
    %162 = vset.pattern.permute.xlu0 2
    %163 = vperm.xlu0 %162, %v140
    %v164 = vpop.permute.xlu0 %163
    %vm165 = vcmp.eq.s32.totalorder %v96, %v164
    %166 = vset.pattern.permute.xlu0 2
    %167 = vperm.xlu0 %166, %v141
    %v168 = vpop.permute.xlu0 %167
    %v170 = vsel %vm165, %v168, 0.0
    %v171 = vadd.f32 %v161, %v170
    %172 = vset.pattern.permute.xlu0 3
    %173 = vperm.xlu0 %172, %v140
    %v174 = vpop.permute.xlu0 %173
    %vm175 = vcmp.eq.s32.totalorder %v96, %v174
    %176 = vset.pattern.permute.xlu0 3
    %177 = vperm.xlu0 %176, %v141
    %v178 = vpop.permute.xlu0 %177
    %v180 = vsel %vm175, %v178, 0.0
    %v181 = vadd.f32 %v171, %v180
    %v182 = vmul.f32 %v139, %v181
    %v183 = vadd.f32 %v138, %v182
    %v184 = vld [vmem:[#allocation2] sm:$0xff]
    %v185 = vadd.f32 %v184, %v183
    %vm186 = vcmask 261120
    %187 = vst.msk [vmem:[#allocation2] sm:$0xff] %vm186, %v185
    // Predicated region
    $region18: #{tpu_custom_call.1} parent=1 // pred_check
      _
    $region19: #{tpu_custom_call.1} parent=1 // pred_check_branch
      %189 = sbr.rel (%p83) target = $region21
    $region20: #{tpu_custom_call.1} parent=1 // pred_region
      %v190 = vld [vmem:[#allocation2] sm:$0xff]
      %v191 = vsel %vm186, %v190, 0.0
      %192 = vadd.xlane.f32.xlu0 %v191
      %v193 = vpop.xlane.xlu0 %192
      %v194 = vrot.slane %v193, 4
      %v195 = vadd.f32 %v193, %v194
      %v196 = vrot.slane %v195, 2
      %v197 = vadd.f32 %v195, %v196
      %v198 = vrot.slane %v197, 1
      %v199 = vadd.f32 %v197, %v198
      %s200 = vtos %v199
      %v201 = vstv %s200
      %202 = vst [vmem:[#allocation3] sm:$0x1] %v201
    $region21: #{tpu_custom_call.1} parent=1 // pred_fallthru
      _
    // Predicated region
    $region22: #{tpu_custom_call.1} parent=1 // pred_check
      _
    $region23: #{tpu_custom_call.1} parent=1 // pred_check_branch
      %204 = sbr.rel (0) target = $region25
    $region24: #{tpu_custom_call.1} parent=1 // pred_region
      %s206 = ssub.s32 16, 16
      %207 = vsyncadd [#allocation4], %s206
      %s209 = sshll.u32 [#allocation3], 4
      %s210 = int_to_ptr.vmem [resolvable:$true] %s209
      %212 = dma.vmem_to_hbm [thread:$0]  %s210, 16, %s3, [#allocation4]
    $region25: #{tpu_custom_call.1} parent=1 // pred_fallthru
      _
    // Predicated region
    $region26: #{tpu_custom_call.1} parent=1 // pred_check
      _
    $region27: #{tpu_custom_call.1} parent=1 // pred_check_branch
      %214 = sbr.rel (0) target = $region29
    $region28: #{tpu_custom_call.1} parent=1 // pred_region
      %215 = dma.done [#allocation4], 16
    $region29: #{tpu_custom_call.1} parent=1 // pred_fallthru
      _
    %216 = vsyncpa [#allocation4], 1

</llo_original>
